<compile_context>
chip_gen: v7x
topology: tpu7x:2x2x1
jax: 0.10.0
libtpu: 0.0.40
codegen_flags: <defaults>
</compile_context>

<pallas_src>
import functools

import jax
import jax.numpy as jnp
from jax.experimental import pallas as pl
from jax.experimental.pallas import tpu as pltpu


# ---------------------------------------------------------------------------
# Kernels
# ---------------------------------------------------------------------------

def _bn_flow_kernel(x_ref, lg_ref, bt_ref, y_ref, stats_ref, *, eps):
    """Single pass: one (N, TILE_D) feature strip; batch reduction over sublanes."""
    x = x_ref[...].astype(jnp.float32)

    mean = jnp.mean(x, axis=0, keepdims=True)               # (1, T)
    diff = x - mean
    var = jnp.mean(diff * diff, axis=0, keepdims=True)      # unbiased=False

    lg = lg_ref[...].astype(jnp.float32)                    # (1, T)
    bt = bt_ref[...].astype(jnp.float32)                    # (1, T)
    scale = jnp.exp(lg) * jax.lax.rsqrt(var + eps)          # EUP rsqrt (free slot)
    shift = bt - mean * scale
    # Fold mean into the affine so the y pass reads x directly (no live (N,T) diff temp).
    y_ref[...] = (x * scale + shift).astype(y_ref.dtype)

    # Packed per-feature stats: row 0 = mean, 1 = var, 2 = logdet term.
    stats_ref[0:1, :] = mean
    stats_ref[1:2, :] = var
    stats_ref[2:3, :] = lg - 0.5 * jnp.log(var + eps)


def _bn_stats_kernel(x_ref, lg_ref, stats_ref, sum_ref, sumsq_ref, *,
                     eps, n_total, tile_n):
    """Two-pass path, pass 1: accumulate per-feature sum/sumsq over N blocks."""
    ni = pl.program_id(1)

    @pl.when(ni == 0)
    def _():
        sum_ref[...] = jnp.zeros_like(sum_ref)
        sumsq_ref[...] = jnp.zeros_like(sumsq_ref)

    x = x_ref[...].astype(jnp.float32)
    # Mask rows of the ragged last N block (OOB reads carry garbage).
    row = jax.lax.broadcasted_iota(jnp.int32, x.shape, 0) + ni * tile_n
    x = jnp.where(row < n_total, x, 0.0)
    sum_ref[...] += jnp.sum(x, axis=0, keepdims=True)
    sumsq_ref[...] += jnp.sum(x * x, axis=0, keepdims=True)

    @pl.when(ni == pl.num_programs(1) - 1)
    def _():
        inv_n = 1.0 / float(n_total)
        mean = sum_ref[...] * inv_n
        # TODO(synk): one-pass E[x^2]-E[x]^2 (f32 accumulation) can lose precision for
        # data with |mean| >> std; clamp keeps var >= 0. Two-pass var would need a
        # third sweep over x.
        var = jnp.maximum(sumsq_ref[...] * inv_n - mean * mean, 0.0)
        lg = lg_ref[...].astype(jnp.float32)
        scale = jnp.exp(lg) * jax.lax.rsqrt(var + eps)
        stats_ref[0:1, :] = mean
        stats_ref[1:2, :] = var
        stats_ref[2:3, :] = lg - 0.5 * jnp.log(var + eps)
        stats_ref[3:4, :] = scale


def _bn_apply_kernel(x_ref, stats_ref, bt_ref, y_ref):
    """Two-pass path, pass 2: streaming y = x*scale + (beta - mean*scale)."""
    x = x_ref[...].astype(jnp.float32)
    mean = stats_ref[0:1, :]
    scale = stats_ref[3:4, :]
    bt = bt_ref[...].astype(jnp.float32)
    y_ref[...] = (x * scale + (bt - mean * scale)).astype(y_ref.dtype)


# ---------------------------------------------------------------------------
# Tiling / VMEM budgeting (generation-aware)
# ---------------------------------------------------------------------------

def _vmem_limits():
    try:
        cap = pltpu.get_tpu_info().vmem_capacity_bytes
    except Exception:
        cap = 64 * 1024 * 1024
    # v5e/v6e (128 MiB physical) -> 64 MiB compiler limit; v7x (64 MiB) -> 48 MiB.
    limit = int(min(cap * 3 // 4, 64 * 1024 * 1024))
    # What tile picking is allowed to spend on explicit strips + full-tile temporaries
    # (leaves headroom for Mosaic internals / spill slack).
    budget = limit * 3 // 4
    return limit, budget


def _round_up(v, m):
    return ((v + m - 1) // m) * m


def _pick_tile_d(n, d, x_bytes, y_bytes, budget):
    """Feature-strip width for the single-pass kernel, or None if N is too large.

    Per-lane accounting: double-buffered x strip + double-buffered y strip + the
    in-VMEM f32 copy of x + one full-tile f32 temporary  ~= (2x + 2y + 8) bytes/elem.
    """
    per_col = (2 * x_bytes + 2 * y_bytes + 8) * n
    d_up = _round_up(d, 128)
    if d <= 128:
        cands = (d,)                              # full-width block (== array dim)
    else:
        cands = tuple(sorted({min(d_up, 1024), 512, 256, 128}, reverse=True))
        cands = tuple(t for t in cands if t <= d_up)
    for t in cands:
        if per_col * t <= budget:
            return t
    return None


def _pick_tiles_two_pass(n, d, x_bytes, y_bytes, budget):
    d_up = _round_up(d, 128)
    tile_d = d if d <= 128 else min(512, d_up)
    per_row = (2 * x_bytes + 2 * y_bytes + 8) * tile_d
    tile_n = (budget // per_row) // 8 * 8
    tile_n = max(8, min(tile_n, _round_up(n, 8)))
    return tile_n, tile_d


# ---------------------------------------------------------------------------
# Wrapper
# ---------------------------------------------------------------------------

def batch_norm_flow_forward(x, log_gamma, beta, running_mean, running_var,
                            *, momentum=0.9, eps=1e-5, training=True,
                            vmem_budget_bytes=None):
    """Forward pass of BatchNormFlow.

    x: (N, D); log_gamma/beta/running_*: (D,).
    Returns (y, log_det_sum, new_running_mean, new_running_var).
    """
    n, d = x.shape

    if not training:
        # Eval mode: stats come from the running buffers; tiny elementwise glue in JAX.
        inv_std = jax.lax.rsqrt(running_var + eps)
        y = jnp.exp(log_gamma)[None, :] * ((x - running_mean[None, :]) * inv_std[None, :]) \
            + beta[None, :]
        logdet = jnp.sum(log_gamma - 0.5 * jnp.log(running_var + eps))
        return y.astype(x.dtype), logdet, running_mean, running_var

    vmem_limit, budget = _vmem_limits()
    if vmem_budget_bytes is not None:      # testing hook
        budget = vmem_budget_bytes

    lg2 = log_gamma.astype(jnp.float32).reshape(1, d)
    bt2 = beta.astype(jnp.float32).reshape(1, d)
    x_bytes = x.dtype.itemsize
    y_bytes = x.dtype.itemsize

    tile_d = _pick_tile_d(n, d, x_bytes, y_bytes, budget)

    # TODO(synk): on v7x confirm the "parallel" feature axis actually shards across
    # both TensorCores; if not, switch that axis to pltpu.CORE_PARALLEL.
    if tile_d is not None:
        # --- single pass: whole batch resident per feature strip -----------------
        y, stats = pl.pallas_call(
            functools.partial(_bn_flow_kernel, eps=eps),
            out_shape=(jax.ShapeDtypeStruct((n, d), x.dtype),
                       jax.ShapeDtypeStruct((3, d), jnp.float32)),
            grid_spec=pltpu.PrefetchScalarGridSpec(
                num_scalar_prefetch=0,
                grid=(pl.cdiv(d, tile_d),),
                in_specs=[
                    pl.BlockSpec((n, tile_d), lambda j: (0, j)),
                    pl.BlockSpec((1, tile_d), lambda j: (0, j)),
                    pl.BlockSpec((1, tile_d), lambda j: (0, j)),
                ],
                out_specs=(
                    pl.BlockSpec((n, tile_d), lambda j: (0, j)),
                    pl.BlockSpec((3, tile_d), lambda j: (0, j)),
                ),
            ),
            compiler_params=pltpu.CompilerParams(
                dimension_semantics=("parallel",),
                vmem_limit_bytes=vmem_limit),
        )(x, lg2, bt2)
        batch_mean, batch_var, logdet_row = stats[0], stats[1], stats[2]
    else:
        # --- two passes over N blocks (large batch) ------------------------------
        tile_n, tile_d2 = _pick_tiles_two_pass(n, d, x_bytes, y_bytes, budget)
        d_tiles = pl.cdiv(d, tile_d2)
        n_tiles = pl.cdiv(n, tile_n)

        stats = pl.pallas_call(
            functools.partial(_bn_stats_kernel, eps=eps, n_total=n, tile_n=tile_n),
            out_shape=jax.ShapeDtypeStruct((4, d), jnp.float32),
            grid_spec=pltpu.PrefetchScalarGridSpec(
                num_scalar_prefetch=0,
                grid=(d_tiles, n_tiles),
                in_specs=[
                    pl.BlockSpec((tile_n, tile_d2), lambda j, i: (i, j)),
                    pl.BlockSpec((1, tile_d2), lambda j, i: (0, j)),
                ],
                out_specs=pl.BlockSpec((4, tile_d2), lambda j, i: (0, j)),
                scratch_shapes=[pltpu.VMEM((1, tile_d2), jnp.float32),
                                pltpu.VMEM((1, tile_d2), jnp.float32)],
            ),
            compiler_params=pltpu.CompilerParams(
                dimension_semantics=("parallel", "arbitrary"),
                vmem_limit_bytes=vmem_limit),
        )(x, lg2)

        y = pl.pallas_call(
            _bn_apply_kernel,
            out_shape=jax.ShapeDtypeStruct((n, d), x.dtype),
            grid_spec=pltpu.PrefetchScalarGridSpec(
                num_scalar_prefetch=0,
                grid=(d_tiles, n_tiles),
                in_specs=[
                    pl.BlockSpec((tile_n, tile_d2), lambda j, i: (i, j)),
                    pl.BlockSpec((4, tile_d2), lambda j, i: (0, j)),
                    pl.BlockSpec((1, tile_d2), lambda j, i: (0, j)),
                ],
                out_specs=pl.BlockSpec((tile_n, tile_d2), lambda j, i: (i, j)),
            ),
            compiler_params=pltpu.CompilerParams(
                dimension_semantics=("parallel", "parallel"),
                vmem_limit_bytes=vmem_limit),
        )(x, stats, bt2)
        batch_mean, batch_var, logdet_row = stats[0], stats[1], stats[2]

    logdet = jnp.sum(logdet_row)
    new_running_mean = momentum * running_mean + (1.0 - momentum) * batch_mean
    new_running_var = momentum * running_var + (1.0 - momentum) * batch_var
    return y, logdet, new_running_mean, new_running_var


# ---------------------------------------------------------------------------
# Reference + self-test
# ---------------------------------------------------------------------------

def _reference_forward(x, log_gamma, beta, eps):
    xf = x.astype(jnp.float32)
    mean = jnp.mean(xf, axis=0)
    var = jnp.mean((xf - mean[None, :]) ** 2, axis=0)
    x_hat = (xf - mean[None, :]) / jnp.sqrt(var + eps)
    y = jnp.exp(log_gamma)[None, :] * x_hat + beta[None, :]
    logdet = jnp.sum(log_gamma - 0.5 * jnp.log(var + eps))
    return y.astype(x.dtype), logdet, mean, var


if __name__ == "__main__":
    key = jax.random.PRNGKey(0)
    eps = 1e-5
    momentum = 0.9

    def run_case(k, n, d, *, vmem_budget_bytes=None, atol=1e-5, rtol=1e-5):
        kx, kg, kb = jax.random.split(k, 3)
        x = jax.random.normal(kx, (n, d), dtype=jnp.float32) * 2.0 + 0.5
        log_gamma = 0.1 * jax.random.normal(kg, (d,), dtype=jnp.float32)
        beta = 0.1 * jax.random.normal(kb, (d,), dtype=jnp.float32)
        running_mean = jnp.zeros((d,), jnp.float32)
        running_var = jnp.ones((d,), jnp.float32)

        y, logdet, new_rm, new_rv = batch_norm_flow_forward(
            x, log_gamma, beta, running_mean, running_var,
            momentum=momentum, eps=eps, training=True,
            vmem_budget_bytes=vmem_budget_bytes)
        jax.block_until_ready((y, logdet, new_rm, new_rv))

        y_ref, logdet_ref, mean_ref, var_ref = _reference_forward(x, log_gamma, beta, eps)
        rm_ref = momentum * running_mean + (1.0 - momentum) * mean_ref
        rv_ref = momentum * running_var + (1.0 - momentum) * var_ref
        assert jnp.allclose(y, y_ref, atol=atol, rtol=rtol), f"y mismatch ({n},{d})"
        assert jnp.allclose(logdet, logdet_ref, atol=atol * d, rtol=rtol), \
            f"logdet mismatch ({n},{d})"
        assert jnp.allclose(new_rm, rm_ref, atol=atol, rtol=rtol), \
            f"running_mean mismatch ({n},{d})"
        assert jnp.allclose(new_rv, rv_ref, atol=atol, rtol=rtol), \
            f"running_var mismatch ({n},{d})"

    k0, k1, k2 = jax.random.split(key, 3)
    # Primary small shape consistent with the module (batch=8, dim=32): single-pass path.
    run_case(k0, 8, 32)
    # D not a multiple of 128: exercises the no-pad ragged feature block.
    run_case(k1, 16, 200)
    # Tiny forced VMEM budget -> two-pass (stats + apply) large-N path, with ragged
    # N and D blocks, at shapes that stay cheap to compile/run.
    run_case(k2, 60, 200, vmem_budget_bytes=32 * 1024, atol=1e-4, rtol=1e-4)

    print("KERNEL_OK")
</pallas_src>

<mosaic_0001>
module attributes {stable_mosaic.version = 11 : i64} {
  func.func @_bn_flow_kernel(%arg0: i32, %arg1: memref<8x32xf32, #tpu.memory_space<vmem>>, %arg2: memref<1x32xf32, #tpu.memory_space<vmem>>, %arg3: memref<1x32xf32, #tpu.memory_space<vmem>>, %arg4: memref<8x32xf32, #tpu.memory_space<vmem>>, %arg5: memref<3x32xf32, #tpu.memory_space<vmem>>) attributes {dimension_semantics = [#tpu.dimension_semantics<parallel>], iteration_bounds = array<i64: 1>, scalar_prefetch = 0 : i64, scratch_operands = 0 : i64, tpu.core_type = #tpu.core_type<tc>, window_params = [{transform_indices = @transform_0, window_bounds = array<i64: 8, 32>}, {transform_indices = @transform_1, window_bounds = array<i64: 1, 32>}, {transform_indices = @transform_2, window_bounds = array<i64: 1, 32>}, {transform_indices = @transform_3, window_bounds = array<i64: 8, 32>}, {transform_indices = @transform_4, window_bounds = array<i64: 3, 32>}]} {
    %c0 = arith.constant 0 : index
    %c0_0 = arith.constant 0 : index
    %0 = vector.load %arg1[%c0, %c0_0] : memref<8x32xf32, #tpu.memory_space<vmem>>, vector<8x32xf32>
    %cst = arith.constant dense<0.000000e+00> : vector<32xf32>
    %1 = vector.multi_reduction <add>, %0, %cst [0] : vector<8x32xf32> to vector<32xf32>
    %2 = vector.shape_cast %1 : vector<32xf32> to vector<1x32xf32>
    %cst_1 = arith.constant 8.000000e+00 : f32
    %3 = vector.broadcast %cst_1 : f32 to vector<1x32xf32>
    %4 = arith.divf %2, %3 : vector<1x32xf32>
    %5 = vector.broadcast %4 : vector<1x32xf32> to vector<8x32xf32>
    %6 = arith.subf %0, %5 : vector<8x32xf32>
    %7 = arith.mulf %6, %6 : vector<8x32xf32>
    %cst_2 = arith.constant dense<0.000000e+00> : vector<32xf32>
    %8 = vector.multi_reduction <add>, %7, %cst_2 [0] : vector<8x32xf32> to vector<32xf32>
    %9 = vector.shape_cast %8 : vector<32xf32> to vector<1x32xf32>
    %cst_3 = arith.constant 8.000000e+00 : f32
    %10 = vector.broadcast %cst_3 : f32 to vector<1x32xf32>
    %11 = arith.divf %9, %10 : vector<1x32xf32>
    %c0_4 = arith.constant 0 : index
    %c0_5 = arith.constant 0 : index
    %12 = vector.load %arg2[%c0_4, %c0_5] : memref<1x32xf32, #tpu.memory_space<vmem>>, vector<1x32xf32>
    %c0_6 = arith.constant 0 : index
    %c0_7 = arith.constant 0 : index
    %13 = vector.load %arg3[%c0_6, %c0_7] : memref<1x32xf32, #tpu.memory_space<vmem>>, vector<1x32xf32>
    %14 = math.exp %12 : vector<1x32xf32>
    %cst_8 = arith.constant 9.99999974E-6 : f32
    %15 = vector.broadcast %cst_8 : f32 to vector<1x32xf32>
    %16 = arith.addf %11, %15 : vector<1x32xf32>
    %17 = math.rsqrt %16 : vector<1x32xf32>
    %18 = arith.mulf %14, %17 : vector<1x32xf32>
    %19 = arith.mulf %4, %18 : vector<1x32xf32>
    %20 = arith.subf %13, %19 : vector<1x32xf32>
    %21 = vector.broadcast %18 : vector<1x32xf32> to vector<8x32xf32>
    %22 = arith.mulf %0, %21 : vector<8x32xf32>
    %23 = vector.broadcast %20 : vector<1x32xf32> to vector<8x32xf32>
    %24 = arith.addf %22, %23 : vector<8x32xf32>
    %c0_9 = arith.constant 0 : index
    %c0_10 = arith.constant 0 : index
    %25 = vector.load %arg4[%c0_9, %c0_10] : memref<8x32xf32, #tpu.memory_space<vmem>>, vector<8x32xf32>
    tpu.vector_store %arg4[%c0_9, %c0_10], %24 {strides = array<i32>} : memref<8x32xf32, #tpu.memory_space<vmem>>, vector<8x32xf32>,
    %c0_11 = arith.constant 0 : index
    %c0_12 = arith.constant 0 : index
    %26 = vector.load %arg5[%c0_11, %c0_12] : memref<3x32xf32, #tpu.memory_space<vmem>>, vector<1x32xf32>
    tpu.vector_store %arg5[%c0_11, %c0_12], %4 {strides = array<i32>} : memref<3x32xf32, #tpu.memory_space<vmem>>, vector<1x32xf32>,
    %c1 = arith.constant 1 : index
    %c0_13 = arith.constant 0 : index
    %27 = vector.load %arg5[%c1, %c0_13] : memref<3x32xf32, #tpu.memory_space<vmem>>, vector<1x32xf32>
    tpu.vector_store %arg5[%c1, %c0_13], %11 {strides = array<i32>} : memref<3x32xf32, #tpu.memory_space<vmem>>, vector<1x32xf32>,
    %cst_14 = arith.constant 9.99999974E-6 : f32
    %28 = vector.broadcast %cst_14 : f32 to vector<1x32xf32>
    %29 = arith.addf %11, %28 : vector<1x32xf32>
    %30 = math.log %29 : vector<1x32xf32>
    %cst_15 = arith.constant 5.000000e-01 : f32
    %31 = vector.broadcast %cst_15 : f32 to vector<1x32xf32>
    %32 = arith.mulf %31, %30 : vector<1x32xf32>
    %33 = arith.subf %12, %32 : vector<1x32xf32>
    %c2 = arith.constant 2 : index
    %c0_16 = arith.constant 0 : index
    %34 = vector.load %arg5[%c2, %c0_16] : memref<3x32xf32, #tpu.memory_space<vmem>>, vector<1x32xf32>
    tpu.vector_store %arg5[%c2, %c0_16], %33 {strides = array<i32>} : memref<3x32xf32, #tpu.memory_space<vmem>>, vector<1x32xf32>,
    return
  }
  func.func @transform_0(%arg0: i32) -> (i32, i32) {
    %c0_i32 = arith.constant 0 : i32
    %c0_i32_0 = arith.constant 0 : i32
    return %c0_i32, %arg0 : i32, i32
  }
  func.func @transform_1(%arg0: i32) -> (i32, i32) {
    %c0_i32 = arith.constant 0 : i32
    %c0_i32_0 = arith.constant 0 : i32
    return %c0_i32, %arg0 : i32, i32
  }
  func.func @transform_2(%arg0: i32) -> (i32, i32) {
    %c0_i32 = arith.constant 0 : i32
    %c0_i32_0 = arith.constant 0 : i32
    return %c0_i32, %arg0 : i32, i32
  }
  func.func @transform_3(%arg0: i32) -> (i32, i32) {
    %c0_i32 = arith.constant 0 : i32
    %c0_i32_0 = arith.constant 0 : i32
    return %c0_i32, %arg0 : i32, i32
  }
  func.func @transform_4(%arg0: i32) -> (i32, i32) {
    %c0_i32 = arith.constant 0 : i32
    %c0_i32_0 = arith.constant 0 : i32
    return %c0_i32, %arg0 : i32, i32
  }
}

</mosaic_0001>

<llo_original>
// kernel: tpu_custom_call.1
$region0: #{tpu_custom_call.1}
  #allocation0 [shape = 'u32[]', space=smem, size = 0x4, offset = 0x4, fixed_abs, tag = 'smem constant byte address 0x4 - core index']
  #allocation1 [shape = 'u32[144,128]{1,0:T(1,128)}', space=vmem, size = 0x12000, scoped, tag = 'internal scratch']
  %s0 = inlined_call_operand.hbm [shape: f32[8,32], index: 0, kind: input, shape index: {}]
  %s1 = inlined_call_operand.vmem [shape: f32[1,32], index: 1, kind: input, shape index: {}]
  %s2 = inlined_call_operand.vmem [shape: f32[1,32], index: 2, kind: input, shape index: {}]
  %s3 = inlined_call_operand.hbm [shape: f32[8,32], index: 3, kind: output, shape index: {0}]
  %s4 = inlined_call_operand.hbm [shape: f32[3,32], index: 4, kind: output, shape index: {1}]
  %5 = xla_tuple %s3, %s4
  %s6 = sld [smem:[#allocation0]]
  $region34: #{tpu_custom_call.1} parent=0
    _
  %s8 = ssub.s32 1, %s6
  %s9 = scalar_select 0, %s8, %s6
  $region1: #{tpu_custom_call.1} parent=0
    #allocation2 [shape = 'u8[4096]{0}', space=vmem, size = 0x1000, scoped, tag = 'input window, operand 0, single buffered']
    #allocation3 [shape = 's32[1]{0}', space=sflag, size = 0x4, scoped, tag = 'scoped memory for tpu_custom_call.1']
    #allocation4 [shape = 's32[1]{0}', space=sflag, size = 0x4, scoped, tag = 'scoped memory for tpu_custom_call.1']
    #allocation5 [shape = 'u8[4096]{0}', space=vmem, size = 0x1000, scoped, tag = 'output window, operand 0, single buffered']
    #allocation6 [shape = 'u8[2048]{0}', space=vmem, size = 0x800, scoped, tag = 'output window, operand 1, single buffered']
    #allocation7 [shape = 's32[1]{0}', space=sflag, size = 0x4, scoped, tag = 'scoped memory for tpu_custom_call.1']
    %10 = vsyncpa [#allocation3], 0
    %11 = vsyncpa [#allocation4], 0
    %12 = vsyncpa [#allocation7], 0
    // Predicated region
    $region2: #{tpu_custom_call.1} parent=1 // pred_check
      _
    $region3: #{tpu_custom_call.1} parent=1 // pred_check_branch
      %14 = sbr.rel (0) target = $region5
    $region4: #{tpu_custom_call.1} parent=1 // pred_region
      %s16 = ssub.s32 128, 128
      %17 = vsyncadd [#allocation3], %s16
      %s19 = sshll.u32 [#allocation2], 4
      %s20 = int_to_ptr.vmem [resolvable:$true] %s19
      %22 = dma.hbm_to_vmem [thread:$0]  %s0, 128, %s20, [#allocation3]
    $region5: #{tpu_custom_call.1} parent=1 // pred_fallthru
      _
    // Predicated region
    $region6: #{tpu_custom_call.1} parent=1 // pred_check
      _
    $region7: #{tpu_custom_call.1} parent=1 // pred_check_branch
      %24 = sbr.rel (0) target = $region9
    $region8: #{tpu_custom_call.1} parent=1 // pred_region
      _
    $region9: #{tpu_custom_call.1} parent=1 // pred_fallthru
      _
    // Predicated region
    $region10: #{tpu_custom_call.1} parent=1 // pred_check
      _
    $region11: #{tpu_custom_call.1} parent=1 // pred_check_branch
      %26 = sbr.rel (0) target = $region13
    $region12: #{tpu_custom_call.1} parent=1 // pred_region
      _
    $region13: #{tpu_custom_call.1} parent=1 // pred_fallthru
      _
    // Predicated region
    $region14: #{tpu_custom_call.1} parent=1 // pred_check
      _
    $region15: #{tpu_custom_call.1} parent=1 // pred_check_branch
      %28 = sbr.rel (0) target = $region17
    $region16: #{tpu_custom_call.1} parent=1 // pred_region
      %29 = dma.done [#allocation3], 128
    $region17: #{tpu_custom_call.1} parent=1 // pred_fallthru
      _
    %v30 = vld [vmem:[#allocation2] sm:$0xff]
    %vm31 = vcmask 261120
    %v32 = vsel %vm31, %v30, 0.0
    %v33 = vrot.slane %v32, 4
    %v34 = vadd.f32 %v32, %v33
    %v35 = vrot.slane %v34, 2
    %v36 = vadd.f32 %v34, %v35
    %v37 = vrot.slane %v36, 1
    %v38 = vadd.f32 %v36, %v37
    %v39 = vrcp.pop 8.0
    %v40 = vmul.f32 %v38, %v39
    %v41 = vsub.f32 %v30, %v40
    %v42 = vmul.f32 %v41, %v41
    %v43 = vsel %vm31, %v42, 0.0
    %v44 = vrot.slane %v43, 4
    %v45 = vadd.f32 %v43, %v44
    %v46 = vrot.slane %v45, 2
    %v47 = vadd.f32 %v45, %v46
    %v48 = vrot.slane %v47, 1
    %v49 = vadd.f32 %v47, %v48
    %v50 = vmul.f32 %v49, %v39
    %v51 = vld [vmem:[%s1] sm:$0x1]
    %v52 = vld [vmem:[%s2] sm:$0x1]
    %v53 = vmul.f32 %v51, 1.442695
    %v54 = vpow.pop %v53
    %v55 = vadd.f32 %v50, 1e-05
    %v56 = vrsqrt.pop %v55
    %v57 = vmul.f32 %v54, %v56
    %v58 = vmul.f32 %v40, %v57
    %v59 = vsub.f32 %v52, %v58
    %v61 = vlaneseq
    %v62 = vshrl.u32 %v61, 7
    %v63 = vsub.s32 0, %v62
    %v64 = vrot.slane %v57, %v63
    %v66 = vmul.f32 %v30, %v64
    %v68 = vlaneseq
    %v69 = vshrl.u32 %v68, 7
    %v70 = vsub.s32 0, %v69
    %v71 = vrot.slane %v59, %v70
    %v73 = vadd.f32 %v66, %v71
    %74 = vst.msk [vmem:[#allocation5] sm:$0xff] %vm31, %v73
    %vm75 = vcmask 253952
    %76 = vst.msk [vmem:[#allocation6] sm:$0x1] %vm75, %v40
    %77 = vst.msk [vmem:[#allocation6 + $0x1] sm:$0x1] %vm75, %v50
    %v78 = vlog2.pop %v55
    %v79 = vmul.f32 %v78, 0.6931472
    %v80 = vmul.f32 %v79, 0.5
    %v81 = vsub.f32 %v51, %v80
    %82 = vst.msk [vmem:[#allocation6 + $0x2] sm:$0x1] %vm75, %v81
    // Predicated region
    $region18: #{tpu_custom_call.1} parent=1 // pred_check
      _
    $region19: #{tpu_custom_call.1} parent=1 // pred_check_branch
      %84 = sbr.rel (0) target = $region21
    $region20: #{tpu_custom_call.1} parent=1 // pred_region
      %s86 = ssub.s32 128, 128
      %87 = vsyncadd [#allocation4], %s86
      %s89 = sshll.u32 [#allocation5], 4
      %s90 = int_to_ptr.vmem [resolvable:$true] %s89
      %92 = dma.vmem_to_hbm [thread:$0]  %s90, 128, %s3, [#allocation4]
    $region21: #{tpu_custom_call.1} parent=1 // pred_fallthru
      _
    // Predicated region
    $region22: #{tpu_custom_call.1} parent=1 // pred_check
      _
    $region23: #{tpu_custom_call.1} parent=1 // pred_check_branch
      %94 = sbr.rel (0) target = $region25
    $region24: #{tpu_custom_call.1} parent=1 // pred_region
      %s96 = ssub.s32 64, 64
      %97 = vsyncadd [#allocation7], %s96
      %s99 = sshll.u32 [#allocation6], 4
      %s100 = int_to_ptr.vmem [resolvable:$true] %s99
      %102 = dma.vmem_to_hbm [thread:$0]  %s100, 64, %s4, [#allocation7]
    $region25: #{tpu_custom_call.1} parent=1 // pred_fallthru
      _
    // Predicated region
    $region26: #{tpu_custom_call.1} parent=1 // pred_check
      _
    $region27: #{tpu_custom_call.1} parent=1 // pred_check_branch
      %104 = sbr.rel (0) target = $region29
    $region28: #{tpu_custom_call.1} parent=1 // pred_region
      %105 = dma.done [#allocation4], 128
    $region29: #{tpu_custom_call.1} parent=1 // pred_fallthru
      _
    // Predicated region
    $region30: #{tpu_custom_call.1} parent=1 // pred_check
      _
    $region31: #{tpu_custom_call.1} parent=1 // pred_check_branch
      %107 = sbr.rel (0) target = $region33
    $region32: #{tpu_custom_call.1} parent=1 // pred_region
      %108 = dma.done [#allocation7], 64
    $region33: #{tpu_custom_call.1} parent=1 // pred_fallthru
      _
    %109 = vsyncpa [#allocation3], 1
    %110 = vsyncpa [#allocation4], 1
    %111 = vsyncpa [#allocation7], 1

</llo_original>
